<compile_context>
chip_gen: v7x
topology: tpu7x:2x2x1
jax: 0.10.0
libtpu: 0.0.40
codegen_flags: <defaults>
</compile_context>

<pallas_src>
import functools

import jax
import jax.numpy as jnp
from jax.experimental import pallas as pl
from jax.experimental.pallas import tpu as pltpu

BN_EPS = 1e-5
_LANE = 128          # lane width / alignment target
_MAX_TK = 4096       # nominal max vocab tile (review: 2048-4096), clipped by VMEM budget
_DBL = 2             # BlockSpec default double-buffering factor


def _round_up(n, m):
    return ((n + m - 1) // m) * m


def _cdiv(a, b):
    return (a + b - 1) // b


@functools.lru_cache(maxsize=1)
def _vmem_capacity_bytes():
    """Physical VMEM per TensorCore; conservative 64 MiB (v7x) fallback."""
    try:
        info = pltpu.get_tpu_info()
        for name in ("vmem_capacity_bytes", "vmem_size_bytes", "vmem_bytes"):
            v = getattr(info, name, None)
            if v:
                return int(v)
    except Exception:
        pass
    return 64 * 1024 * 1024


def _vmem_limit(need_bytes, cap):
    """vmem_limit_bytes = computed need + headroom, capped below physical."""
    return int(min(int(cap * 0.9),
                   max(32 * 1024 * 1024, need_bytes + 16 * 1024 * 1024)))


# ----------------------------------------------------------------------------
# Kernel bodies
# ----------------------------------------------------------------------------
def _tail_math(h1_bf16, b2, w2, wh, bn_b, bn_g, bn_beta, num_topics):
    """fc2+softplus, fused mu|lv head, training-mode BatchNorm, [mu | sigma]."""
    h2 = jax.nn.softplus(
        jnp.dot(h1_bf16, w2, preferred_element_type=jnp.float32) + b2)
    z = jnp.dot(h2.astype(jnp.bfloat16), wh,
                preferred_element_type=jnp.float32) + bn_b
    mean = jnp.mean(z, axis=0, keepdims=True)
    cen = z - mean
    var = jnp.mean(cen * cen, axis=0, keepdims=True)      # biased batch variance
    z_bn = cen * jax.lax.rsqrt(var + BN_EPS) * bn_g + bn_beta
    col = jax.lax.broadcasted_iota(jnp.int32, z_bn.shape, 1)
    # Lane-dense output: [mu | sigma] where sigma = exp(0.5 * lv).
    return jnp.where(col < num_topics, z_bn, jnp.exp(0.5 * z_bn))


def _fused_kernel(x_ref, w1_ref, b1_ref, b2_ref, w2_ref, wh_ref, bnh_ref,
                  out_ref, *, num_topics):
    """Fast path: everything resident in VMEM, single invocation, no K loop."""
    acc = jnp.dot(x_ref[...], w1_ref[...], preferred_element_type=jnp.float32)
    h1 = jax.nn.softplus(acc + b1_ref[...])
    out_ref[...] = _tail_math(h1.astype(jnp.bfloat16), b2_ref[...], w2_ref[...],
                              wh_ref[...], bnh_ref[0:1, :], bnh_ref[1:2, :],
                              bnh_ref[2:3, :], num_topics)


def _fc1_kernel(x_ref, w1_ref, b1_ref, h1_ref):
    """K-tiled fc1.  Grid (n_h 'parallel', n_k 'arbitrary'); the (B, th) output
    block is revisited across the vocab axis and acts as the f32 accumulator."""
    k = pl.program_id(1)

    @pl.when(k == 0)
    def _():
        h1_ref[...] = jnp.zeros_like(h1_ref)

    h1_ref[...] += jnp.dot(x_ref[...], w1_ref[...],
                           preferred_element_type=jnp.float32)

    @pl.when(k == pl.num_programs(1) - 1)
    def _():
        h1_ref[...] = jax.nn.softplus(h1_ref[...] + b1_ref[...])


def _tail_kernel(h1_ref, b2_ref, w2_ref, wh_ref, bnh_ref, out_ref, *, num_topics):
    """Epilogue for the large-vocab path (tiny; single invocation)."""
    out_ref[...] = _tail_math(h1_ref[...].astype(jnp.bfloat16), b2_ref[...],
                              w2_ref[...], wh_ref[...], bnh_ref[0:1, :],
                              bnh_ref[1:2, :], bnh_ref[2:3, :], num_topics)


# ----------------------------------------------------------------------------
# Parameter packing (pad to MXU/lane-friendly shapes, fuse heads)
# ----------------------------------------------------------------------------
def pack_params(raw):
    """raw: PyTorch-style params with weights stored as [in, out].

    Pads Hp / 2Tp to 128-lane multiples; the vocab axis is padded only to a
    multiple of 128 (and, when > _MAX_TK, to n_k * tk with a balanced
    128-multiple tk), so padding waste is bounded by < n_k*128 rows.

    IMPORTANT (correctness): rows [H:Hp] of w2 and w_heads MUST remain zero.
    Padded h1/h2 columns take the value softplus(0)=ln2 and only stay inert
    because those weight rows are zeroed here (asserted below).
    """
    V, H = raw["w1"].shape
    T = raw["wmu"].shape[1]

    Hp = _round_up(H, _LANE)
    T2p = _round_up(2 * T, _LANE)

    # Minimal lane-aligned vocab pad; only extend further (slightly) so that
    # Vp splits into <= _MAX_TK-sized 128-multiple tiles.
    Vp0 = _round_up(V, _LANE)
    v_blocks = Vp0 // _LANE
    max_blocks = _MAX_TK // _LANE
    if v_blocks <= max_blocks:
        Vp = Vp0
    else:
        n_k = _cdiv(v_blocks, max_blocks)
        Vp = n_k * _cdiv(v_blocks, n_k) * _LANE

    f32, bf16 = jnp.float32, jnp.bfloat16

    w1 = jnp.zeros((Vp, Hp), f32).at[:V, :H].set(raw["w1"]).astype(bf16)
    w2 = jnp.zeros((Hp, Hp), f32).at[:H, :H].set(raw["w2"]).astype(bf16)

    wh = jnp.zeros((Hp, T2p), f32)
    wh = wh.at[:H, :T].set(raw["wmu"]).at[:H, T:2 * T].set(raw["wlv"]).astype(bf16)

    b1 = jnp.zeros((1, Hp), f32).at[0, :H].set(raw["b1"].reshape(-1))
    b2 = jnp.zeros((1, Hp), f32).at[0, :H].set(raw["b2"].reshape(-1))

    bnh = jnp.zeros((3, T2p), f32)
    bnh = bnh.at[0, :T].set(raw["bmu"].reshape(-1)).at[0, T:2 * T].set(raw["blv"].reshape(-1))
    bnh = bnh.at[1, :T].set(raw["gmu"].reshape(-1)).at[1, T:2 * T].set(raw["glv"].reshape(-1))
    bnh = bnh.at[2, :T].set(raw["betamu"].reshape(-1)).at[2, T:2 * T].set(raw["betalv"].reshape(-1))

    # Guard the padding invariant (cheap, eager; protects future repacks).
    assert bool(jnp.all(w2[H:, :] == 0)) and bool(jnp.all(wh[H:, :] == 0))

    return {"w1": w1, "b1": b1, "b2": b2, "w2": w2, "w_heads": wh, "bn_head": bnh}


# ----------------------------------------------------------------------------
# Large-vocab path: parallel K-tiled fc1 kernel + tiny epilogue kernel
# ----------------------------------------------------------------------------
def _tiled_forward(xp, packed, B, Vp, Hp, T2p, num_topics, max_tk, cap, budget):
    # Split the fc1 output columns across a leading "parallel" axis so v7x's
    # two TensorCores each stream half of W1 (near-zero effect on 1-TC chips).
    h_blocks = Hp // _LANE
    if h_blocks >= 2 and h_blocks % 2 == 0:
        n_h = 2
    elif h_blocks >= 3 and h_blocks % 3 == 0:
        n_h = 3
    else:
        n_h = 1
    th = Hp // n_h

    # Largest vocab tile (multiple of 128 that divides Vp) under the budget.
    v_blocks = Vp // _LANE
    per_block = _DBL * (B * 2 + th * 2) * _LANE        # x + w1 bytes per 128 cols
    fixed = _DBL * (th * 4 + B * th * 4)               # b1 + resident h1 block
    max_blocks = max(1, (budget - fixed) // per_block)
    max_blocks = min(max_blocks, _MAX_TK // _LANE, v_blocks)
    if max_tk is not None:
        max_blocks = min(max_blocks, max(1, max_tk // _LANE))
    tk_blocks = 1
    for d in range(int(max_blocks), 0, -1):
        if v_blocks % d == 0:
            tk_blocks = d
            break
    tk = tk_blocks * _LANE
    n_k = v_blocks // tk_blocks

    fc1_need = _DBL * (B * tk * 2 + tk * th * 2 + th * 4 + B * th * 4)
    fc1_cost = pl.CostEstimate(
        flops=2 * B * Vp * Hp,
        transcendentals=2 * B * Hp,
        bytes_accessed=(B * Vp * 2 + Vp * Hp * 2 + Hp * 4 + B * Hp * 4))

    h1 = pl.pallas_call(
        _fc1_kernel,
        out_shape=jax.ShapeDtypeStruct((B, Hp), jnp.float32),
        grid=(n_h, n_k),
        in_specs=[
            pl.BlockSpec((B, tk), lambda j, k: (0, k)),    # x vocab tile
            pl.BlockSpec((tk, th), lambda j, k: (k, j)),   # w1 tile
            pl.BlockSpec((1, th), lambda j, k: (0, j)),    # b1 column tile
        ],
        out_specs=pl.BlockSpec((B, th), lambda j, k: (0, j)),
        compiler_params=pltpu.CompilerParams(
            dimension_semantics=("parallel", "arbitrary"),
            vmem_limit_bytes=_vmem_limit(fc1_need, cap)),
        cost_estimate=fc1_cost,
    )(xp, packed["w1"], packed["b1"])

    # Epilogue: fc2 + heads + BatchNorm on the small (B, Hp) intermediate.
    # (All operands are single-fetch here, so pl.Buffered(1) on loop-invariant
    # inputs is unnecessary -- nothing is double-streamed alongside W1 anymore.)
    tail_need = _DBL * (B * Hp * 4 + Hp * 4 + Hp * Hp * 2 + Hp * T2p * 2
                        + 3 * T2p * 4 + B * T2p * 4)
    out = pl.pallas_call(
        functools.partial(_tail_kernel, num_topics=num_topics),
        out_shape=jax.ShapeDtypeStruct((B, T2p), jnp.float32),
        grid=(1,),
        in_specs=[
            pl.BlockSpec((B, Hp), lambda i: (0, 0)),
            pl.BlockSpec((1, Hp), lambda i: (0, 0)),
            pl.BlockSpec((Hp, Hp), lambda i: (0, 0)),
            pl.BlockSpec((Hp, T2p), lambda i: (0, 0)),
            pl.BlockSpec((3, T2p), lambda i: (0, 0)),
        ],
        out_specs=pl.BlockSpec((B, T2p), lambda i: (0, 0)),
        compiler_params=pltpu.CompilerParams(
            dimension_semantics=("arbitrary",),
            vmem_limit_bytes=_vmem_limit(tail_need, cap)),
    )(h1, packed["b2"], packed["w2"], packed["w_heads"], packed["bn_head"])
    return out


# ----------------------------------------------------------------------------
# Wrapper
# ----------------------------------------------------------------------------
@functools.partial(jax.jit, static_argnames=("num_topics", "max_tk"))
def encoder_forward(x, packed, num_topics, max_tk=None):
    """Returns (mu, sigma) of the LogNormal posterior.  x: [B, V] float32.

    Throughput note: at B<=16 the kernel is purely W1-bandwidth bound; larger
    batches (up to ~128-256 rows) amortize the W1 stream essentially for free.
    `max_tk` (static, optional) caps the vocab tile -- used to force/test the
    K-tiled multi-core path on small shapes.
    """
    B, V = x.shape
    Vp, Hp = packed["w1"].shape
    T2p = packed["w_heads"].shape[1]

    cap = _vmem_capacity_bytes()
    budget = int(cap * 0.45)          # working-set budget; rest is headroom

    # Pad vocab axis with zeros and cast to bf16 (halves x HBM traffic too).
    xp = jnp.zeros((B, Vp), jnp.bfloat16).at[:, :V].set(x.astype(jnp.bfloat16))

    bytes_small = (packed["b1"].size + packed["b2"].size
                   + packed["bn_head"].size) * 4
    fused_need = _DBL * (B * Vp * 2 + Vp * Hp * 2 + Hp * Hp * 2
                         + Hp * T2p * 2 + B * T2p * 4) + _DBL * bytes_small
    fast_ok = (fused_need <= budget) and (max_tk is None or Vp <= max_tk)

    if fast_ok:
        cost = pl.CostEstimate(
            flops=2 * B * (Vp * Hp + Hp * Hp + Hp * T2p),
            transcendentals=B * (4 * Hp + T2p),
            bytes_accessed=(B * Vp * 2 + Vp * Hp * 2 + Hp * Hp * 2
                            + Hp * T2p * 2 + bytes_small + B * T2p * 4))
        out = pl.pallas_call(
            functools.partial(_fused_kernel, num_topics=num_topics),
            out_shape=jax.ShapeDtypeStruct((B, T2p), jnp.float32),
            grid=(1,),
            in_specs=[
                pl.BlockSpec((B, Vp), lambda i: (0, 0)),     # x (resident)
                pl.BlockSpec((Vp, Hp), lambda i: (0, 0)),    # w1 (resident)
                pl.BlockSpec((1, Hp), lambda i: (0, 0)),     # b1
                pl.BlockSpec((1, Hp), lambda i: (0, 0)),     # b2
                pl.BlockSpec((Hp, Hp), lambda i: (0, 0)),    # w2
                pl.BlockSpec((Hp, T2p), lambda i: (0, 0)),   # [wmu | wlv]
                pl.BlockSpec((3, T2p), lambda i: (0, 0)),    # [b; gamma; beta]
            ],
            out_specs=pl.BlockSpec((B, T2p), lambda i: (0, 0)),
            compiler_params=pltpu.CompilerParams(
                dimension_semantics=("arbitrary",),
                vmem_limit_bytes=_vmem_limit(fused_need, cap)),
            cost_estimate=cost,
        )(xp, packed["w1"], packed["b1"], packed["b2"], packed["w2"],
          packed["w_heads"], packed["bn_head"])
    else:
        out = _tiled_forward(xp, packed, B, Vp, Hp, T2p, num_topics,
                             max_tk, cap, budget)

    mu = out[:, :num_topics]
    sigma = out[:, num_topics:2 * num_topics]
    return mu, sigma


# ----------------------------------------------------------------------------
# Parameters / references
# ----------------------------------------------------------------------------
def init_params(key, vocab_size, hidden_size, num_topics):
    """Deterministic synthetic parameters (weights stored as [in, out])."""
    ks = jax.random.split(key, 8)
    scale = 0.05
    return {
        "w1": scale * jax.random.normal(ks[0], (vocab_size, hidden_size), jnp.float32),
        "b1": scale * jax.random.normal(ks[1], (1, hidden_size), jnp.float32),
        "w2": scale * jax.random.normal(ks[2], (hidden_size, hidden_size), jnp.float32),
        "b2": scale * jax.random.normal(ks[3], (1, hidden_size), jnp.float32),
        "wmu": scale * jax.random.normal(ks[4], (hidden_size, num_topics), jnp.float32),
        "bmu": scale * jax.random.normal(ks[5], (1, num_topics), jnp.float32),
        "wlv": scale * jax.random.normal(ks[6], (hidden_size, num_topics), jnp.float32),
        "blv": scale * jax.random.normal(ks[7], (1, num_topics), jnp.float32),
        "gmu": jnp.ones((1, num_topics), jnp.float32),
        "betamu": jnp.zeros((1, num_topics), jnp.float32),
        "glv": jnp.ones((1, num_topics), jnp.float32),
        "betalv": jnp.zeros((1, num_topics), jnp.float32),
    }


def _bn_ref(z, g, b):
    m = jnp.mean(z, axis=0, keepdims=True)
    v = jnp.mean((z - m) ** 2, axis=0, keepdims=True)
    return (z - m) / jnp.sqrt(v + BN_EPS) * g + b


def _reference_forward_f32(x, p):
    """Pure-f32 JAX reference of the PyTorch semantics."""
    h1 = jax.nn.softplus(x @ p["w1"] + p["b1"])
    h2 = jax.nn.softplus(h1 @ p["w2"] + p["b2"])
    mu = _bn_ref(h2 @ p["wmu"] + p["bmu"], p["gmu"], p["betamu"])
    lv = _bn_ref(h2 @ p["wlv"] + p["blv"], p["glv"], p["betalv"])
    return mu, jnp.exp(0.5 * lv)


def _reference_forward_bf16(x, p):
    """Reference matching the kernel's bf16-operand / f32-accumulate matmuls."""
    def mm(a, w):
        return jnp.dot(a.astype(jnp.bfloat16), w.astype(jnp.bfloat16),
                       preferred_element_type=jnp.float32)
    h1 = jax.nn.softplus(mm(x, p["w1"]) + p["b1"])
    h2 = jax.nn.softplus(mm(h1, p["w2"]) + p["b2"])
    mu = _bn_ref(mm(h2, p["wmu"]) + p["bmu"], p["gmu"], p["betamu"])
    lv = _bn_ref(mm(h2, p["wlv"]) + p["blv"], p["glv"], p["betalv"])
    return mu, jnp.exp(0.5 * lv)


# ----------------------------------------------------------------------------
# Test
# ----------------------------------------------------------------------------
if __name__ == "__main__":
    key = jax.random.PRNGKey(0)

    # (batch, vocab_size, hidden_size, num_topics, max_tk)
    #   - first two exercise the single-invocation fused fast path
    #   - the third forces the K-tiled fc1 path (max_tk=256 -> 3 vocab tiles)
    #     with a 2-way parallel Hp split (hidden=200 -> Hp=256)
    configs = [
        (8, 128, 64, 16, None),
        (16, 640, 96, 20, None),
        (8, 640, 200, 16, 256),
    ]

    for batch, vocab_size, hidden_size, num_topics, max_tk in configs:
        k_x, k_p, key = jax.random.split(key, 3)

        # Synthetic word-count-like input (non-negative).
        x = jax.random.uniform(k_x, (batch, vocab_size), jnp.float32) * 3.0
        raw = init_params(k_p, vocab_size, hidden_size, num_topics)
        packed = pack_params(raw)

        mu, sigma = encoder_forward(x, packed, num_topics=num_topics, max_tk=max_tk)
        jax.block_until_ready((mu, sigma))

        assert mu.shape == (batch, num_topics)
        assert sigma.shape == (batch, num_topics)
        assert bool(jnp.all(jnp.isfinite(mu))) and bool(jnp.all(jnp.isfinite(sigma)))
        assert bool(jnp.all(sigma > 0))

        # Tight check vs. a reference using identical bf16-operand matmuls.
        mu_bref, sig_bref = _reference_forward_bf16(x, raw)
        assert jnp.allclose(mu, mu_bref, atol=2e-3, rtol=2e-3)
        assert jnp.allclose(sigma, sig_bref, atol=2e-3, rtol=2e-3)

        # Loose sanity check vs. pure-f32 semantics (BN amplifies bf16 noise).
        mu_f32, sig_f32 = _reference_forward_f32(x, raw)
        assert jnp.allclose(mu, mu_f32, atol=0.25, rtol=0.25)
        assert jnp.allclose(sigma, sig_f32, atol=0.25, rtol=0.25)

    print("KERNEL_OK")
</pallas_src>

<mosaic_0001>
module attributes {stable_mosaic.version = 11 : i64} {
  func.func @_fused_kernel(%arg0: i32, %arg1: memref<8x128xbf16, #tpu.memory_space<vmem>>, %arg2: memref<128x128xbf16, #tpu.memory_space<vmem>>, %arg3: memref<1x128xf32, #tpu.memory_space<vmem>>, %arg4: memref<1x128xf32, #tpu.memory_space<vmem>>, %arg5: memref<128x128xbf16, #tpu.memory_space<vmem>>, %arg6: memref<128x128xbf16, #tpu.memory_space<vmem>>, %arg7: memref<3x128xf32, #tpu.memory_space<vmem>>, %arg8: memref<8x128xf32, #tpu.memory_space<vmem>>) attributes {dimension_semantics = [#tpu.dimension_semantics<arbitrary>], iteration_bounds = array<i64: 1>, scalar_prefetch = 0 : i64, scratch_operands = 0 : i64, tpu.core_type = #tpu.core_type<tc>, window_params = [{pipeline_mode = #tpu.pipeline_mode<synchronous>, transform_indices = @transform_0, window_bounds = array<i64: 8, 128>}, {pipeline_mode = #tpu.pipeline_mode<synchronous>, transform_indices = @transform_1, window_bounds = array<i64: 128, 128>}, {pipeline_mode = #tpu.pipeline_mode<synchronous>, transform_indices = @transform_2, window_bounds = array<i64: 1, 128>}, {pipeline_mode = #tpu.pipeline_mode<synchronous>, transform_indices = @transform_3, window_bounds = array<i64: 1, 128>}, {pipeline_mode = #tpu.pipeline_mode<synchronous>, transform_indices = @transform_4, window_bounds = array<i64: 128, 128>}, {pipeline_mode = #tpu.pipeline_mode<synchronous>, transform_indices = @transform_5, window_bounds = array<i64: 128, 128>}, {pipeline_mode = #tpu.pipeline_mode<synchronous>, transform_indices = @transform_6, window_bounds = array<i64: 3, 128>}, {pipeline_mode = #tpu.pipeline_mode<synchronous>, transform_indices = @transform_7, window_bounds = array<i64: 8, 128>}]} {
    %c0 = arith.constant 0 : index
    %c0_0 = arith.constant 0 : index
    %0 = vector.load %arg1[%c0, %c0_0] : memref<8x128xbf16, #tpu.memory_space<vmem>>, vector<8x128xbf16>
    %c0_1 = arith.constant 0 : index
    %c0_2 = arith.constant 0 : index
    %1 = vector.load %arg2[%c0_1, %c0_2] : memref<128x128xbf16, #tpu.memory_space<vmem>>, vector<128x128xbf16>
    %cst = arith.constant dense<0.000000e+00> : vector<8x128xf32>
    %2 = tpu.matmul %0, %1, %cst {dimension_numbers = #tpu.dot_dimension_numbers<[1], [0], [0], [1], [0, 0, 1, 1], [], []>} : vector<8x128xbf16>, vector<128x128xbf16>, vector<8x128xf32> -> vector<8x128xf32>
    %c0_3 = arith.constant 0 : index
    %c0_4 = arith.constant 0 : index
    %3 = vector.load %arg3[%c0_3, %c0_4] : memref<1x128xf32, #tpu.memory_space<vmem>>, vector<1x128xf32>
    %4 = vector.broadcast %3 : vector<1x128xf32> to vector<8x128xf32>
    %5 = arith.addf %2, %4 : vector<8x128xf32>
    %cst_5 = arith.constant 0.000000e+00 : f32
    %6 = vector.broadcast %cst_5 : f32 to vector<8x128xf32>
    %7 = arith.maximumf %5, %6 : vector<8x128xf32>
    %8 = vector.broadcast %cst_5 : f32 to vector<8x128xf32>
    %9 = arith.subf %5, %8 : vector<8x128xf32>
    %10 = arith.cmpf one, %9, %9 : vector<8x128xf32>
    %11 = vector.broadcast %cst_5 : f32 to vector<8x128xf32>
    %12 = arith.addf %5, %11 : vector<8x128xf32>
    %13 = math.absf %9 : vector<8x128xf32>
    %cst_6 = arith.constant 0.000000e+00 : f32
    %14 = vector.broadcast %cst_6 : f32 to vector<8x128xf32>
    %15 = arith.subf %14, %13 : vector<8x128xf32>
    %16 = math.exp %15 : vector<8x128xf32>
    %17 = math.log1p %16 : vector<8x128xf32>
    %18 = arith.addf %7, %17 : vector<8x128xf32>
    %19 = arith.select %10, %12, %18 : vector<8x128xi1>, vector<8x128xf32>
    %20 = arith.truncf %19 : vector<8x128xf32> to vector<8x128xbf16>
    %c0_7 = arith.constant 0 : index
    %c0_8 = arith.constant 0 : index
    %21 = vector.load %arg4[%c0_7, %c0_8] : memref<1x128xf32, #tpu.memory_space<vmem>>, vector<1x128xf32>
    %c0_9 = arith.constant 0 : index
    %c0_10 = arith.constant 0 : index
    %22 = vector.load %arg5[%c0_9, %c0_10] : memref<128x128xbf16, #tpu.memory_space<vmem>>, vector<128x128xbf16>
    %c0_11 = arith.constant 0 : index
    %c0_12 = arith.constant 0 : index
    %23 = vector.load %arg6[%c0_11, %c0_12] : memref<128x128xbf16, #tpu.memory_space<vmem>>, vector<128x128xbf16>
    %c0_13 = arith.constant 0 : index
    %c0_14 = arith.constant 0 : index
    %24 = vector.load %arg7[%c0_13, %c0_14] : memref<3x128xf32, #tpu.memory_space<vmem>>, vector<1x128xf32>
    %c1 = arith.constant 1 : index
    %c0_15 = arith.constant 0 : index
    %25 = vector.load %arg7[%c1, %c0_15] : memref<3x128xf32, #tpu.memory_space<vmem>>, vector<1x128xf32>
    %c2 = arith.constant 2 : index
    %c0_16 = arith.constant 0 : index
    %26 = vector.load %arg7[%c2, %c0_16] : memref<3x128xf32, #tpu.memory_space<vmem>>, vector<1x128xf32>
    %cst_17 = arith.constant dense<0.000000e+00> : vector<8x128xf32>
    %27 = tpu.matmul %20, %22, %cst_17 {dimension_numbers = #tpu.dot_dimension_numbers<[1], [0], [0], [1], [0, 0, 1, 1], [], []>} : vector<8x128xbf16>, vector<128x128xbf16>, vector<8x128xf32> -> vector<8x128xf32>
    %28 = vector.broadcast %21 : vector<1x128xf32> to vector<8x128xf32>
    %29 = arith.addf %27, %28 : vector<8x128xf32>
    %cst_18 = arith.constant 0.000000e+00 : f32
    %30 = vector.broadcast %cst_18 : f32 to vector<8x128xf32>
    %31 = arith.maximumf %29, %30 : vector<8x128xf32>
    %32 = vector.broadcast %cst_18 : f32 to vector<8x128xf32>
    %33 = arith.subf %29, %32 : vector<8x128xf32>
    %34 = arith.cmpf one, %33, %33 : vector<8x128xf32>
    %35 = vector.broadcast %cst_18 : f32 to vector<8x128xf32>
    %36 = arith.addf %29, %35 : vector<8x128xf32>
    %37 = math.absf %33 : vector<8x128xf32>
    %cst_19 = arith.constant 0.000000e+00 : f32
    %38 = vector.broadcast %cst_19 : f32 to vector<8x128xf32>
    %39 = arith.subf %38, %37 : vector<8x128xf32>
    %40 = math.exp %39 : vector<8x128xf32>
    %41 = math.log1p %40 : vector<8x128xf32>
    %42 = arith.addf %31, %41 : vector<8x128xf32>
    %43 = arith.select %34, %36, %42 : vector<8x128xi1>, vector<8x128xf32>
    %44 = arith.truncf %43 : vector<8x128xf32> to vector<8x128xbf16>
    %cst_20 = arith.constant dense<0.000000e+00> : vector<8x128xf32>
    %45 = tpu.matmul %44, %23, %cst_20 {dimension_numbers = #tpu.dot_dimension_numbers<[1], [0], [0], [1], [0, 0, 1, 1], [], []>} : vector<8x128xbf16>, vector<128x128xbf16>, vector<8x128xf32> -> vector<8x128xf32>
    %46 = vector.broadcast %24 : vector<1x128xf32> to vector<8x128xf32>
    %47 = arith.addf %45, %46 : vector<8x128xf32>
    %cst_21 = arith.constant dense<0.000000e+00> : vector<128xf32>
    %48 = vector.multi_reduction <add>, %47, %cst_21 [0] : vector<8x128xf32> to vector<128xf32>
    %49 = vector.shape_cast %48 : vector<128xf32> to vector<1x128xf32>
    %cst_22 = arith.constant 8.000000e+00 : f32
    %50 = vector.broadcast %cst_22 : f32 to vector<1x128xf32>
    %51 = arith.divf %49, %50 : vector<1x128xf32>
    %52 = vector.broadcast %51 : vector<1x128xf32> to vector<8x128xf32>
    %53 = arith.subf %47, %52 : vector<8x128xf32>
    %54 = arith.mulf %53, %53 : vector<8x128xf32>
    %cst_23 = arith.constant dense<0.000000e+00> : vector<128xf32>
    %55 = vector.multi_reduction <add>, %54, %cst_23 [0] : vector<8x128xf32> to vector<128xf32>
    %56 = vector.shape_cast %55 : vector<128xf32> to vector<1x128xf32>
    %cst_24 = arith.constant 8.000000e+00 : f32
    %57 = vector.broadcast %cst_24 : f32 to vector<1x128xf32>
    %58 = arith.divf %56, %57 : vector<1x128xf32>
    %cst_25 = arith.constant 9.99999974E-6 : f32
    %59 = vector.broadcast %cst_25 : f32 to vector<1x128xf32>
    %60 = arith.addf %58, %59 : vector<1x128xf32>
    %61 = math.rsqrt %60 : vector<1x128xf32>
    %62 = vector.broadcast %61 : vector<1x128xf32> to vector<8x128xf32>
    %63 = arith.mulf %53, %62 : vector<8x128xf32>
    %64 = vector.broadcast %25 : vector<1x128xf32> to vector<8x128xf32>
    %65 = arith.mulf %63, %64 : vector<8x128xf32>
    %66 = vector.broadcast %26 : vector<1x128xf32> to vector<8x128xf32>
    %67 = arith.addf %65, %66 : vector<8x128xf32>
    %68 = tpu.iota {dimensions = array<i32: 1>} : vector<8x128xi32>
    %c16_i32 = arith.constant 16 : i32
    %69 = vector.broadcast %c16_i32 : i32 to vector<8x128xi32>
    %70 = arith.cmpi slt, %68, %69 : vector<8x128xi32>
    %cst_26 = arith.constant 5.000000e-01 : f32
    %71 = vector.broadcast %cst_26 : f32 to vector<8x128xf32>
    %72 = arith.mulf %71, %67 : vector<8x128xf32>
    %73 = math.exp %72 : vector<8x128xf32>
    %74 = arith.select %70, %67, %73 : vector<8x128xi1>, vector<8x128xf32>
    %c0_27 = arith.constant 0 : index
    %c0_28 = arith.constant 0 : index
    %75 = vector.load %arg8[%c0_27, %c0_28] : memref<8x128xf32, #tpu.memory_space<vmem>>, vector<8x128xf32>
    tpu.vector_store %arg8[%c0_27, %c0_28], %74 {strides = array<i32>} : memref<8x128xf32, #tpu.memory_space<vmem>>, vector<8x128xf32>,
    return
  }
  func.func @transform_0(%arg0: i32) -> (i32, i32) {
    %c0_i32 = arith.constant 0 : i32
    %c0_i32_0 = arith.constant 0 : i32
    %c0_i32_1 = arith.constant 0 : i32
    return %c0_i32, %c0_i32_0 : i32, i32
  }
  func.func @transform_1(%arg0: i32) -> (i32, i32) {
    %c0_i32 = arith.constant 0 : i32
    %c0_i32_0 = arith.constant 0 : i32
    %c0_i32_1 = arith.constant 0 : i32
    return %c0_i32, %c0_i32_0 : i32, i32
  }
  func.func @transform_2(%arg0: i32) -> (i32, i32) {
    %c0_i32 = arith.constant 0 : i32
    %c0_i32_0 = arith.constant 0 : i32
    %c0_i32_1 = arith.constant 0 : i32
    return %c0_i32, %c0_i32_0 : i32, i32
  }
  func.func @transform_3(%arg0: i32) -> (i32, i32) {
    %c0_i32 = arith.constant 0 : i32
    %c0_i32_0 = arith.constant 0 : i32
    %c0_i32_1 = arith.constant 0 : i32
    return %c0_i32, %c0_i32_0 : i32, i32
  }
  func.func @transform_4(%arg0: i32) -> (i32, i32) {
    %c0_i32 = arith.constant 0 : i32
    %c0_i32_0 = arith.constant 0 : i32
    %c0_i32_1 = arith.constant 0 : i32
    return %c0_i32, %c0_i32_0 : i32, i32
  }
  func.func @transform_5(%arg0: i32) -> (i32, i32) {
    %c0_i32 = arith.constant 0 : i32
    %c0_i32_0 = arith.constant 0 : i32
    %c0_i32_1 = arith.constant 0 : i32
    return %c0_i32, %c0_i32_0 : i32, i32
  }
  func.func @transform_6(%arg0: i32) -> (i32, i32) {
    %c0_i32 = arith.constant 0 : i32
    %c0_i32_0 = arith.constant 0 : i32
    %c0_i32_1 = arith.constant 0 : i32
    return %c0_i32, %c0_i32_0 : i32, i32
  }
  func.func @transform_7(%arg0: i32) -> (i32, i32) {
    %c0_i32 = arith.constant 0 : i32
    %c0_i32_0 = arith.constant 0 : i32
    %c0_i32_1 = arith.constant 0 : i32
    return %c0_i32, %c0_i32_0 : i32, i32
  }
}

</mosaic_0001>

<llo_original>
// kernel: encoder_forward.1
$region0: #{encoder_forward.1}
  #allocation0 [shape = 'u32[]', space=smem, size = 0x4, offset = 0x4, fixed_abs, tag = 'smem constant byte address 0x4 - core index']
  #allocation1 [shape = 'u32[144,128]{1,0:T(1,128)}', space=vmem, size = 0x12000, scoped, tag = 'internal scratch']
  %s0 = inlined_call_operand.vmem [shape: bf16[8,128], index: 0, kind: input, shape index: {}]
  %s1 = inlined_call_operand.hbm [shape: bf16[128,128], index: 1, kind: input, shape index: {}]
  %s2 = inlined_call_operand.vmem [shape: f32[1,128], index: 2, kind: input, shape index: {}]
  %s3 = inlined_call_operand.vmem [shape: f32[1,128], index: 3, kind: input, shape index: {}]
  %s4 = inlined_call_operand.hbm [shape: bf16[128,128], index: 4, kind: input, shape index: {}]
  %s5 = inlined_call_operand.hbm [shape: bf16[128,128], index: 5, kind: input, shape index: {}]
  %s6 = inlined_call_operand.vmem [shape: f32[3,128], index: 6, kind: input, shape index: {}]
  %s7 = inlined_call_operand.vmem [shape: f32[8,128], index: 7, kind: output, shape index: {}]
  %s8 = sld [smem:[#allocation0]]
  $region50: #{encoder_forward.1} parent=0
    _
  %s10 = ssub.s32 1, %s8
  %s11 = scalar_select 0, %s10, %s8
  $region1: #{encoder_forward.1} parent=0
    #allocation2 [shape = 'u8[32768]{0}', space=vmem, size = 0x8000, scoped, tag = 'input window, operand 1, single buffered']
    #allocation3 [shape = 's32[1]{0}', space=sflag, size = 0x4, scoped, tag = 'scoped memory for encoder_forward.1']
    #allocation4 [shape = 'u8[32768]{0}', space=vmem, size = 0x8000, scoped, tag = 'input window, operand 4, single buffered']
    #allocation5 [shape = 's32[1]{0}', space=sflag, size = 0x4, scoped, tag = 'scoped memory for encoder_forward.1']
    #allocation6 [shape = 'u8[32768]{0}', space=vmem, size = 0x8000, scoped, tag = 'input window, operand 5, single buffered']
    %12 = vsyncpa [#allocation3], 0
    %13 = vsyncpa [#allocation5], 0
    // Predicated region
    $region2: #{encoder_forward.1} parent=1 // pred_check
      _
    $region3: #{encoder_forward.1} parent=1 // pred_check_branch
      %15 = sbr.rel (0) target = $region5
    $region4: #{encoder_forward.1} parent=1 // pred_region
      _
    $region5: #{encoder_forward.1} parent=1 // pred_fallthru
      _
    // Predicated region
    $region6: #{encoder_forward.1} parent=1 // pred_check
      _
    $region7: #{encoder_forward.1} parent=1 // pred_check_branch
      %17 = sbr.rel (0) target = $region9
    $region8: #{encoder_forward.1} parent=1 // pred_region
      %s19 = ssub.s32 1024, 1024
      %20 = vsyncadd [#allocation3], %s19
      %s21 = sshll.u32 [#allocation2], 4
      %s22 = int_to_ptr.vmem [resolvable:$true] %s21
      %27 = dma.hbm_to_vmem [thread:$0]  %s1, 1024, %s22, [#allocation3], 64, 64, 4
    $region9: #{encoder_forward.1} parent=1 // pred_fallthru
      _
    // Predicated region
    $region10: #{encoder_forward.1} parent=1 // pred_check
      _
    $region11: #{encoder_forward.1} parent=1 // pred_check_branch
      %29 = sbr.rel (0) target = $region13
    $region12: #{encoder_forward.1} parent=1 // pred_region
      _
    $region13: #{encoder_forward.1} parent=1 // pred_fallthru
      _
    // Predicated region
    $region14: #{encoder_forward.1} parent=1 // pred_check
      _
    $region15: #{encoder_forward.1} parent=1 // pred_check_branch
      %31 = sbr.rel (0) target = $region17
    $region16: #{encoder_forward.1} parent=1 // pred_region
      _
    $region17: #{encoder_forward.1} parent=1 // pred_fallthru
      _
    // Predicated region
    $region18: #{encoder_forward.1} parent=1 // pred_check
      _
    $region19: #{encoder_forward.1} parent=1 // pred_check_branch
      %33 = sbr.rel (0) target = $region21
    $region20: #{encoder_forward.1} parent=1 // pred_region
      %s35 = ssub.s32 1024, 1024
      %36 = vsyncadd [#allocation5], %s35
      %s37 = sshll.u32 [#allocation4], 4
      %s38 = int_to_ptr.vmem [resolvable:$true] %s37
      %43 = dma.hbm_to_vmem [thread:$0]  %s4, 1024, %s38, [#allocation5], 64, 64, 4
    $region21: #{encoder_forward.1} parent=1 // pred_fallthru
      _
    // Predicated region
    $region22: #{encoder_forward.1} parent=1 // pred_check
      _
    $region23: #{encoder_forward.1} parent=1 // pred_check_branch
      %45 = sbr.rel (0) target = $region25
    $region24: #{encoder_forward.1} parent=1 // pred_region
      %s47 = ssub.s32 1024, 1024
      %48 = vsyncadd [#allocation5], %s47
      %s49 = sshll.u32 [#allocation6], 4
      %s50 = int_to_ptr.vmem [resolvable:$true] %s49
      %55 = dma.hbm_to_vmem [thread:$0]  %s5, 1024, %s50, [#allocation5], 64, 64, 4
    $region25: #{encoder_forward.1} parent=1 // pred_fallthru
      _
    // Predicated region
    $region26: #{encoder_forward.1} parent=1 // pred_check
      _
    $region27: #{encoder_forward.1} parent=1 // pred_check_branch
      %57 = sbr.rel (0) target = $region29
    $region28: #{encoder_forward.1} parent=1 // pred_region
      _
    $region29: #{encoder_forward.1} parent=1 // pred_fallthru
      _
    // Predicated region
    $region30: #{encoder_forward.1} parent=1 // pred_check
      _
    $region31: #{encoder_forward.1} parent=1 // pred_check_branch
      %59 = sbr.rel (0) target = $region33
    $region32: #{encoder_forward.1} parent=1 // pred_region
      %60 = dma.done [#allocation3], 1024
    $region33: #{encoder_forward.1} parent=1 // pred_fallthru
      _
    // Predicated region
    $region34: #{encoder_forward.1} parent=1 // pred_check
      _
    $region35: #{encoder_forward.1} parent=1 // pred_check_branch
      %62 = sbr.rel (0) target = $region37
    $region36: #{encoder_forward.1} parent=1 // pred_region
      %63 = dma.done [#allocation5], 1024
    $region37: #{encoder_forward.1} parent=1 // pred_fallthru
      _
    // Predicated region
    $region38: #{encoder_forward.1} parent=1 // pred_check
      _
    $region39: #{encoder_forward.1} parent=1 // pred_check_branch
      %65 = sbr.rel (0) target = $region41
    $region40: #{encoder_forward.1} parent=1 // pred_region
      %66 = dma.done [#allocation5], 1024
    $region41: #{encoder_forward.1} parent=1 // pred_fallthru
      _
    %v68 = vld [vmem:[%s0] sm:$0xf]
    %v69 = vld [vmem:[#allocation2] sm:$0xf]
    %v70 = vld [vmem:[#allocation2 + $0x4] sm:$0xf]
    %v71 = vld [vmem:[#allocation2 + $0x8] sm:$0xf]
    %v72 = vld [vmem:[#allocation2 + $0xc] sm:$0xf]
    %v73 = vld [vmem:[#allocation2 + $0x10] sm:$0xf]
    %v74 = vld [vmem:[#allocation2 + $0x14] sm:$0xf]
    %v75 = vld [vmem:[#allocation2 + $0x18] sm:$0xf]
    %v76 = vld [vmem:[#allocation2 + $0x1c] sm:$0xf]
    %v77 = vld [vmem:[#allocation2 + $0x20] sm:$0xf]
    %v78 = vld [vmem:[#allocation2 + $0x24] sm:$0xf]
    %v79 = vld [vmem:[#allocation2 + $0x28] sm:$0xf]
    %v80 = vld [vmem:[#allocation2 + $0x2c] sm:$0xf]
    %v81 = vld [vmem:[#allocation2 + $0x30] sm:$0xf]
    %v82 = vld [vmem:[#allocation2 + $0x34] sm:$0xf]
    %v83 = vld [vmem:[#allocation2 + $0x38] sm:$0xf]
    %v84 = vld [vmem:[#allocation2 + $0x3c] sm:$0xf]
    %v85 = vld [vmem:[%s2] sm:$0x1]
    %v87 = vlaneseq
    %v88 = vshrl.u32 %v87, 7
    %v89 = vsub.s32 0, %v88
    %v90 = vrot.slane %v85, %v89
    %v108 = vunpack.c.l.b16 %v69
    %v109 = vunpack.c.l.b16 %v70
    %v110 = vunpack.c.l.b16 %v71
    %v111 = vunpack.c.l.b16 %v72
    %v112 = vunpack.c.l.b16 %v73
    %v113 = vunpack.c.l.b16 %v74
    %v114 = vunpack.c.l.b16 %v75
    %v115 = vunpack.c.l.b16 %v76
    %v116 = vunpack.c.l.b16 %v77
    %v117 = vunpack.c.l.b16 %v78
    %v118 = vunpack.c.l.b16 %v79
    %v119 = vunpack.c.l.b16 %v80
    %v120 = vunpack.c.l.b16 %v81
    %v121 = vunpack.c.l.b16 %v82
    %v122 = vunpack.c.l.b16 %v83
    %v123 = vunpack.c.l.b16 %v84
    %v124 = vpack.c.b16 %v109, %v108
    %v125 = vpack.c.b16 %v111, %v110
    %v126 = vpack.c.b16 %v113, %v112
    %v127 = vpack.c.b16 %v115, %v114
    %v128 = vpack.c.b16 %v117, %v116
    %v129 = vpack.c.b16 %v119, %v118
    %v130 = vpack.c.b16 %v121, %v120
    %v131 = vpack.c.b16 %v123, %v122
    %140 = vmatprep.subr.bf16.mxu0 0
    %141 = vmatpush1.bf16.msra.mxu0 %v124
    %142 = vmatprep.subr.bf16.mxu0 0
    %143 = vmatpush1.bf16.msra.mxu0 %v125
    %144 = vmatprep.subr.bf16.mxu0 0
    %145 = vmatpush1.bf16.msra.mxu0 %v126
    %146 = vmatprep.subr.bf16.mxu0 0
    %147 = vmatpush1.bf16.msra.mxu0 %v127
    %148 = vmatprep.subr.bf16.mxu0 0
    %149 = vmatpush1.bf16.msra.mxu0 %v128
    %150 = vmatprep.subr.bf16.mxu0 0
    %151 = vmatpush1.bf16.msra.mxu0 %v129
    %152 = vmatprep.subr.bf16.mxu0 0
    %153 = vmatpush1.bf16.msra.mxu0 %v130
    %154 = vmatprep.subr.bf16.mxu0 0
    %155 = vmatpush1.bf16.msra.mxu0 %v131
    %156 = vmatprep.subr.bf16.mxu0 0
    %157 = vmatpush1.bf16.msra.mxu0 0
    %158 = vmatprep.subr.bf16.mxu0 0
    %159 = vmatpush1.bf16.msra.mxu0 0
    %160 = vmatprep.subr.bf16.mxu0 0
    %161 = vmatpush1.bf16.msra.mxu0 0
    %162 = vmatprep.subr.bf16.mxu0 0
    %163 = vmatpush1.bf16.msra.mxu0 0
    %164 = vmatprep.subr.bf16.mxu0 0
    %165 = vmatpush1.bf16.msra.mxu0 0
    %166 = vmatprep.subr.bf16.mxu0 0
    %167 = vmatpush1.bf16.msra.mxu0 0
    %168 = vmatprep.subr.bf16.mxu0 0
    %169 = vmatpush1.bf16.msra.mxu0 0
    %170 = vmatprep.subr.bf16.mxu0 0
    %171 = vmatpush1.bf16.msra.mxu0 0
    %172 = vmatprep.mubr.bf16.mxu0 0
    %173 = vmatmul.mubr.bf16.gmra.mrb[0].mxu0 %v68
    %v174 = vpop.f32.mrb[0].mxu0
    %v175 = vadd.f32 %v90, %v174
    %v176 = vpop.f32.mrb[0].mxu0
    %v177 = vpop.f32.mrb[0].mxu0
    %v178 = vpop.f32.mrb[0].mxu0
    %179 = vdwg.mxu0
    %v180 = vmax.f32 %v175, 0.0
    %vm181 = vcmp.ne.f32.partialorder %v175, %v175
    %v182 = vadd.f32 %v175, 0.0
    %v183 = vand.u32 2147483647, %v175
    %v184 = vsub.f32 0.0, %v183
    %v185 = vmul.f32 %v184, 1.442695
    %v186 = vpow.pop %v185
    %v187 = vadd.f32 %v186, 1.0
    %v188 = vlog2.pop %v187
    %v189 = vmul.f32 %v188, 0.6931472
    %v190 = vmul.f32 -0.5, %v186
    %v191 = vadd.f32 %v190, 1.0
    %v192 = vmul.f32 %v191, %v186
    %v193 = vand.u32 2147483647, %v186
    %vm194 = vcmp.lt.f32.partialorder %v193, 0.0004427343
    %v195 = vsel %vm194, %v192, %v189
    %v196 = vadd.f32 %v180, %v195
    %v197 = vsel %vm181, %v182, %v196
    %v198 = vpack.c.bf16 %v197, %v197
    %v199 = vld [vmem:[%s3] sm:$0x1]
    %v200 = vld [vmem:[#allocation4] sm:$0xf]
    %v201 = vld [vmem:[#allocation4 + $0x4] sm:$0xf]
    %v202 = vld [vmem:[#allocation4 + $0x8] sm:$0xf]
    %v203 = vld [vmem:[#allocation4 + $0xc] sm:$0xf]
    %v204 = vld [vmem:[#allocation4 + $0x10] sm:$0xf]
    %v205 = vld [vmem:[#allocation4 + $0x14] sm:$0xf]
    %v206 = vld [vmem:[#allocation4 + $0x18] sm:$0xf]
    %v207 = vld [vmem:[#allocation4 + $0x1c] sm:$0xf]
    %v208 = vld [vmem:[#allocation4 + $0x20] sm:$0xf]
    %v209 = vld [vmem:[#allocation4 + $0x24] sm:$0xf]
    %v210 = vld [vmem:[#allocation4 + $0x28] sm:$0xf]
    %v211 = vld [vmem:[#allocation4 + $0x2c] sm:$0xf]
    %v212 = vld [vmem:[#allocation4 + $0x30] sm:$0xf]
    %v213 = vld [vmem:[#allocation4 + $0x34] sm:$0xf]
    %v214 = vld [vmem:[#allocation4 + $0x38] sm:$0xf]
    %v215 = vld [vmem:[#allocation4 + $0x3c] sm:$0xf]
    %v216 = vld [vmem:[#allocation6] sm:$0xf]
    %v217 = vld [vmem:[#allocation6 + $0x4] sm:$0xf]
    %v218 = vld [vmem:[#allocation6 + $0x8] sm:$0xf]
    %v219 = vld [vmem:[#allocation6 + $0xc] sm:$0xf]
    %v220 = vld [vmem:[#allocation6 + $0x10] sm:$0xf]
    %v221 = vld [vmem:[#allocation6 + $0x14] sm:$0xf]
    %v222 = vld [vmem:[#allocation6 + $0x18] sm:$0xf]
    %v223 = vld [vmem:[#allocation6 + $0x1c] sm:$0xf]
    %v224 = vld [vmem:[#allocation6 + $0x20] sm:$0xf]
    %v225 = vld [vmem:[#allocation6 + $0x24] sm:$0xf]
    %v226 = vld [vmem:[#allocation6 + $0x28] sm:$0xf]
    %v227 = vld [vmem:[#allocation6 + $0x2c] sm:$0xf]
    %v228 = vld [vmem:[#allocation6 + $0x30] sm:$0xf]
    %v229 = vld [vmem:[#allocation6 + $0x34] sm:$0xf]
    %v230 = vld [vmem:[#allocation6 + $0x38] sm:$0xf]
    %v231 = vld [vmem:[#allocation6 + $0x3c] sm:$0xf]
    %v232 = vld [vmem:[%s6] sm:$0x1]
    %v233 = vld [vmem:[%s6 + $0x1] sm:$0x1]
    %v234 = vld [vmem:[%s6 + $0x2] sm:$0x1]
    %v236 = vlaneseq
    %v237 = vshrl.u32 %v236, 7
    %v238 = vsub.s32 0, %v237
    %v239 = vrot.slane %v199, %v238
    %v257 = vunpack.c.l.b16 %v200
    %v258 = vunpack.c.l.b16 %v201
    %v259 = vunpack.c.l.b16 %v202
    %v260 = vunpack.c.l.b16 %v203
    %v261 = vunpack.c.l.b16 %v204
    %v262 = vunpack.c.l.b16 %v205
    %v263 = vunpack.c.l.b16 %v206
    %v264 = vunpack.c.l.b16 %v207
    %v265 = vunpack.c.l.b16 %v208
    %v266 = vunpack.c.l.b16 %v209
    %v267 = vunpack.c.l.b16 %v210
    %v268 = vunpack.c.l.b16 %v211
    %v269 = vunpack.c.l.b16 %v212
    %v270 = vunpack.c.l.b16 %v213
    %v271 = vunpack.c.l.b16 %v214
    %v272 = vunpack.c.l.b16 %v215
    %v273 = vpack.c.b16 %v258, %v257
    %v274 = vpack.c.b16 %v260, %v259
    %v275 = vpack.c.b16 %v262, %v261
    %v276 = vpack.c.b16 %v264, %v263
    %v277 = vpack.c.b16 %v266, %v265
    %v278 = vpack.c.b16 %v268, %v267
    %v279 = vpack.c.b16 %v270, %v269
    %v280 = vpack.c.b16 %v272, %v271
    %289 = vmatprep.subr.bf16.mxu0 0
    %290 = vmatpush1.bf16.msra.mxu0 %v273
    %291 = vmatprep.subr.bf16.mxu0 0
    %292 = vmatpush1.bf16.msra.mxu0 %v274
    %293 = vmatprep.subr.bf16.mxu0 0
    %294 = vmatpush1.bf16.msra.mxu0 %v275
    %295 = vmatprep.subr.bf16.mxu0 0
    %296 = vmatpush1.bf16.msra.mxu0 %v276
    %297 = vmatprep.subr.bf16.mxu0 0
    %298 = vmatpush1.bf16.msra.mxu0 %v277
    %299 = vmatprep.subr.bf16.mxu0 0
    %300 = vmatpush1.bf16.msra.mxu0 %v278
    %301 = vmatprep.subr.bf16.mxu0 0
    %302 = vmatpush1.bf16.msra.mxu0 %v279
    %303 = vmatprep.subr.bf16.mxu0 0
    %304 = vmatpush1.bf16.msra.mxu0 %v280
    %305 = vmatprep.subr.bf16.mxu0 0
    %306 = vmatpush1.bf16.msra.mxu0 0
    %307 = vmatprep.subr.bf16.mxu0 0
    %308 = vmatpush1.bf16.msra.mxu0 0
    %309 = vmatprep.subr.bf16.mxu0 0
    %310 = vmatpush1.bf16.msra.mxu0 0
    %311 = vmatprep.subr.bf16.mxu0 0
    %312 = vmatpush1.bf16.msra.mxu0 0
    %313 = vmatprep.subr.bf16.mxu0 0
    %314 = vmatpush1.bf16.msra.mxu0 0
    %315 = vmatprep.subr.bf16.mxu0 0
    %316 = vmatpush1.bf16.msra.mxu0 0
    %317 = vmatprep.subr.bf16.mxu0 0
    %318 = vmatpush1.bf16.msra.mxu0 0
    %319 = vmatprep.subr.bf16.mxu0 0
    %320 = vmatpush1.bf16.msra.mxu0 0
    %321 = vmatprep.mubr.bf16.mxu0 0
    %322 = vmatmul.mubr.bf16.gmra.mrb[0].mxu0 %v198
    %v323 = vpop.f32.mrb[0].mxu0
    %v324 = vadd.f32 %v239, %v323
    %v325 = vpop.f32.mrb[0].mxu0
    %v326 = vpop.f32.mrb[0].mxu0
    %v327 = vpop.f32.mrb[0].mxu0
    %328 = vdwg.mxu0
    %v329 = vmax.f32 %v324, 0.0
    %vm330 = vcmp.ne.f32.partialorder %v324, %v324
    %v331 = vadd.f32 %v324, 0.0
    %v332 = vand.u32 2147483647, %v324
    %v333 = vsub.f32 0.0, %v332
    %v334 = vmul.f32 %v333, 1.442695
    %v335 = vpow.pop %v334
    %v336 = vadd.f32 %v335, 1.0
    %v337 = vlog2.pop %v336
    %v338 = vmul.f32 %v337, 0.6931472
    %v339 = vmul.f32 -0.5, %v335
    %v340 = vadd.f32 %v339, 1.0
    %v341 = vmul.f32 %v340, %v335
    %v342 = vand.u32 2147483647, %v335
    %vm343 = vcmp.lt.f32.partialorder %v342, 0.0004427343
    %v344 = vsel %vm343, %v341, %v338
    %v345 = vadd.f32 %v329, %v344
    %v346 = vsel %vm330, %v331, %v345
    %v347 = vpack.c.bf16 %v346, %v346
    %v348 = vlaneseq
    %v349 = vshrl.u32 %v348, 7
    %v350 = vsub.s32 0, %v349
    %v351 = vrot.slane %v232, %v350
    %v368 = vunpack.c.l.b16 %v216
    %v369 = vunpack.c.l.b16 %v217
    %v370 = vunpack.c.l.b16 %v218
    %v371 = vunpack.c.l.b16 %v219
    %v372 = vunpack.c.l.b16 %v220
    %v373 = vunpack.c.l.b16 %v221
    %v374 = vunpack.c.l.b16 %v222
    %v375 = vunpack.c.l.b16 %v223
    %v376 = vunpack.c.l.b16 %v224
    %v377 = vunpack.c.l.b16 %v225
    %v378 = vunpack.c.l.b16 %v226
    %v379 = vunpack.c.l.b16 %v227
    %v380 = vunpack.c.l.b16 %v228
    %v381 = vunpack.c.l.b16 %v229
    %v382 = vunpack.c.l.b16 %v230
    %v383 = vunpack.c.l.b16 %v231
    %v384 = vpack.c.b16 %v369, %v368
    %v385 = vpack.c.b16 %v371, %v370
    %v386 = vpack.c.b16 %v373, %v372
    %v387 = vpack.c.b16 %v375, %v374
    %v388 = vpack.c.b16 %v377, %v376
    %v389 = vpack.c.b16 %v379, %v378
    %v390 = vpack.c.b16 %v381, %v380
    %v391 = vpack.c.b16 %v383, %v382
    %400 = vmatprep.subr.bf16.mxu0 0
    %401 = vmatpush1.bf16.msra.mxu0 %v384
    %402 = vmatprep.subr.bf16.mxu0 0
    %403 = vmatpush1.bf16.msra.mxu0 %v385
    %404 = vmatprep.subr.bf16.mxu0 0
    %405 = vmatpush1.bf16.msra.mxu0 %v386
    %406 = vmatprep.subr.bf16.mxu0 0
    %407 = vmatpush1.bf16.msra.mxu0 %v387
    %408 = vmatprep.subr.bf16.mxu0 0
    %409 = vmatpush1.bf16.msra.mxu0 %v388
    %410 = vmatprep.subr.bf16.mxu0 0
    %411 = vmatpush1.bf16.msra.mxu0 %v389
    %412 = vmatprep.subr.bf16.mxu0 0
    %413 = vmatpush1.bf16.msra.mxu0 %v390
    %414 = vmatprep.subr.bf16.mxu0 0
    %415 = vmatpush1.bf16.msra.mxu0 %v391
    %416 = vmatprep.subr.bf16.mxu0 0
    %417 = vmatpush1.bf16.msra.mxu0 0
    %418 = vmatprep.subr.bf16.mxu0 0
    %419 = vmatpush1.bf16.msra.mxu0 0
    %420 = vmatprep.subr.bf16.mxu0 0
    %421 = vmatpush1.bf16.msra.mxu0 0
    %422 = vmatprep.subr.bf16.mxu0 0
    %423 = vmatpush1.bf16.msra.mxu0 0
    %424 = vmatprep.subr.bf16.mxu0 0
    %425 = vmatpush1.bf16.msra.mxu0 0
    %426 = vmatprep.subr.bf16.mxu0 0
    %427 = vmatpush1.bf16.msra.mxu0 0
    %428 = vmatprep.subr.bf16.mxu0 0
    %429 = vmatpush1.bf16.msra.mxu0 0
    %430 = vmatprep.subr.bf16.mxu0 0
    %431 = vmatpush1.bf16.msra.mxu0 0
    %432 = vmatprep.mubr.bf16.mxu0 0
    %433 = vmatmul.mubr.bf16.gmra.mrb[0].mxu0 %v347
    %v434 = vpop.f32.mrb[0].mxu0
    %v435 = vadd.f32 %v351, %v434
    %v436 = vpop.f32.mrb[0].mxu0
    %v437 = vpop.f32.mrb[0].mxu0
    %v438 = vpop.f32.mrb[0].mxu0
    %439 = vdwg.mxu0
    %v440 = vrot.slane %v435, 4
    %v441 = vadd.f32 %v435, %v440
    %v442 = vrot.slane %v441, 2
    %v443 = vadd.f32 %v441, %v442
    %v444 = vrot.slane %v443, 1
    %v445 = vadd.f32 %v443, %v444
    %v446 = vrcp.pop 8.0
    %v447 = vmul.f32 %v445, %v446
    %v448 = vsub.f32 %v435, %v447
    %v449 = vmul.f32 %v448, %v448
    %v450 = vrot.slane %v449, 4
    %v451 = vadd.f32 %v449, %v450
    %v452 = vrot.slane %v451, 2
    %v453 = vadd.f32 %v451, %v452
    %v454 = vrot.slane %v453, 1
    %v455 = vadd.f32 %v453, %v454
    %v456 = vmul.f32 %v455, %v446
    %v457 = vadd.f32 %v456, 1e-05
    %v458 = vrsqrt.pop %v457
    %v459 = vmul.f32 %v448, %v458
    %v460 = vlaneseq
    %v461 = vshrl.u32 %v460, 7
    %v462 = vsub.s32 0, %v461
    %v463 = vrot.slane %v233, %v462
    %v464 = vmul.f32 %v459, %v463
    %v465 = vlaneseq
    %v466 = vshrl.u32 %v465, 7
    %v467 = vsub.s32 0, %v466
    %v468 = vrot.slane %v234, %v467
    %v469 = vadd.f32 %v464, %v468
    %v470 = vlaneseq
    %v471 = vand.u32 %v470, 127
    %vm472 = vcmp.lt.s32.totalorder %v471, 16
    %v473 = vmul.f32 %v469, 0.5
    %v474 = vmul.f32 %v473, 1.442695
    %v475 = vpow.pop %v474
    %v476 = vsel %vm472, %v469, %v475
    %477 = vst [vmem:[%s7] sm:$0xff] %v476
    // Predicated region
    $region42: #{encoder_forward.1} parent=1 // pred_check
      _
    $region43: #{encoder_forward.1} parent=1 // pred_check_branch
      %479 = sbr.rel (0) target = $region45
    $region44: #{encoder_forward.1} parent=1 // pred_region
      _
    $region45: #{encoder_forward.1} parent=1 // pred_fallthru
      _
    // Predicated region
    $region46: #{encoder_forward.1} parent=1 // pred_check
      _
    $region47: #{encoder_forward.1} parent=1 // pred_check_branch
      %481 = sbr.rel (0) target = $region49
    $region48: #{encoder_forward.1} parent=1 // pred_region
      _
    $region49: #{encoder_forward.1} parent=1 // pred_fallthru
      _
    %482 = vsyncpa [#allocation3], 1
    %483 = vsyncpa [#allocation5], 1

</llo_original>
